<compile_context>
chip_gen: v5e
topology: v5e:2x2
jax: 0.10.0
libtpu: 0.0.40
codegen_flags: <defaults>
</compile_context>

<pallas_src>
import functools

import jax
import jax.numpy as jnp
from jax.experimental import pallas as pl
from jax.experimental.pallas import tpu as pltpu


def _attention_kernel(mask_val, inv_temperature,
                      keyaug_ref, q_ref, mask_ref,
                      wk_ref, wv_ref, bv_ref, wsc_ref,
                      ctx_ref, attn_ref):
    # keyaug_ref: (TB*M, E+K)  [key | unfolded alpha], native dtype
    # q_ref:      (TB, D)      query @ Wq + (bq + bk + folded conv/pos bias)
    # mask_ref:   (TB, M)      int32, lane-major
    # wk_ref:     (E+K, D)     [Wk ; conv∘pos_fc folded]
    # wv_ref:     (E+K, D)     [Wv ; 0]
    # bv_ref:     (1, D)
    # wsc_ref:    (1, D)       scoring vector w^T
    # outputs:    ctx (TB, D), attn (TB, M)  (lane-dense)
    tbm, _ = keyaug_ref.shape
    tb, d = q_ref.shape
    m = tbm // tb

    ka = keyaug_ref[...]                                   # native dtype -> MXU
    kf = jnp.dot(ka, wk_ref[...], preferred_element_type=jnp.float32)  # k + f
    v = jnp.dot(ka, wv_ref[...], preferred_element_type=jnp.float32) + bv_ref[...]

    kf3 = kf.reshape(tb, m, d)                             # M multiple of 8 -> free
    v3 = v.reshape(tb, m, d)

    # e = tanh(q + k + f); q broadcast over the M (sublane) axis.
    e = jnp.tanh(kf3 + q_ref[...].astype(jnp.float32)[:, None, :])      # (TB,M,D)

    # additive score e @ w as elementwise mul + lane reduce (an output-N=1
    # MXU matmul would waste the systolic array); result is lane-major (TB,M).
    s = jnp.sum(e * wsc_ref[...], axis=-1)                               # (TB, M)

    # masked_fill(~mask, mask_val) BEFORE the temperature, as in the reference.
    s = jnp.where(mask_ref[...] > 0, s, mask_val)
    s = s * inv_temperature

    # softmax over M (lane axis) -- lane-dense VPU/EUP work.
    s_max = jnp.max(s, axis=-1, keepdims=True)
    p = jnp.exp(s - s_max)
    attn = p / jnp.sum(p, axis=-1, keepdims=True)                        # (TB, M)

    attn_ref[...] = attn.astype(attn_ref.dtype)

    # context[b, :] = attn[b, :] @ value[b, :, :]  (flash-style batched matmul;
    # attn is already lane-major so the MXU LHS needs no relayout).
    ctx3 = jnp.einsum('bqm,bmd->bqd', attn[:, None, :], v3,
                      preferred_element_type=jnp.float32)                # (TB,1,D)
    ctx_ref[...] = ctx3.reshape(tb, d).astype(ctx_ref.dtype)


def loc_aware_global_add_attention(key, query, alpha, mask, params, *,
                                   inv_temperature=1.0, mask_val=-1e12):
    """key: [B, M, E], query: [B, 1, D], alpha: [B, 1, M], mask: [B, M] or None.

    Returns (context [B, 1, D], attn_weights [B, 1, M])."""
    B, M, E = key.shape
    D = params["wq"].shape[0]
    K = params["conv_w"].shape[-1]
    EK = E + K
    f32 = jnp.float32

    # ---- wrapper-side linear folds (one-time, O(K*D + D*D + B*D*D)) ----
    wc_mat = jnp.transpose(params["conv_w"][:, 0, :]).astype(f32)        # (K, D)
    wp = params["wp"].astype(f32)
    wcp = wc_mat @ wp                                                    # (K, D)
    b_cp = params["conv_b"].astype(f32) @ wp + params["bp"].astype(f32)  # (D,)

    # query projection hoisted out of the kernel; all biases folded into it.
    q_all = (query.reshape(B, D).astype(f32) @ params["wq"].astype(f32)
             + params["bq"].astype(f32) + params["bk"].astype(f32) + b_cp)  # (B, D)

    # location feature folded into the key matmul.
    wk_aug = jnp.concatenate([params["wk"].astype(f32), wcp], axis=0)        # (EK, D)
    wv_aug = jnp.concatenate([params["wv"].astype(f32),
                              jnp.zeros((K, D), f32)], axis=0)               # (EK, D)

    # unfold alpha for the 'same'-padded Conv1d(in_channels=1)
    alpha2 = alpha.reshape(B, M)
    left = (K - 1) // 2
    right = K - 1 - left
    alpha_pad = jnp.pad(alpha2, ((0, 0), (left, right)))
    idx = jnp.arange(M)[:, None] + jnp.arange(K)[None, :]                    # (M, K)
    alpha_unf = alpha_pad[:, idx]                                            # (B, M, K)

    key_aug = jnp.concatenate([key, alpha_unf.astype(key.dtype)], axis=-1)   # (B, M, EK)

    if mask is None:
        mask2 = jnp.ones((B, M), jnp.int32)
    else:
        mask2 = mask.astype(jnp.int32).reshape(B, M)

    # ---- tiling: TB batches per grid step ----
    m_pad = ((M + 7) // 8) * 8                       # sublane-aligned M
    target_rows = 256                                # fills v6e/v7x MXU rows (>=128 ok on v5e)
    tb = max(1, min(B, target_rows // m_pad))
    # keep >=2 grid steps for the v7x 2-TC megacore split when that still
    # leaves >=128 MXU rows per step.
    if B >= 2 and B // tb < 2 and (B // 2) * m_pad >= 128:
        tb = max(1, B // 2)
    # VMEM budget: the double-buffered key_aug tile dominates; keep it under
    # ~24 MiB (comfortable inside v7x's 64 MiB physical VMEM).
    tile_bytes = m_pad * EK * key.dtype.itemsize
    tb = min(tb, max(1, (24 * 1024 * 1024) // (2 * max(tile_bytes, 1))))

    nb = -(-B // tb)
    b_pad = nb * tb

    def pad_bm(x):
        pads = [(0, b_pad - B), (0, m_pad - M)] + [(0, 0)] * (x.ndim - 2)
        return jnp.pad(x, pads)

    key_aug_g = pad_bm(key_aug).reshape(nb, tb * m_pad, EK)
    mask_g = pad_bm(mask2).reshape(nb, tb, m_pad)
    q_g = jnp.pad(q_all, ((0, b_pad - B), (0, 0))).reshape(nb, tb, D)

    kern = functools.partial(_attention_kernel, float(mask_val),
                             float(inv_temperature))

    def per_step(*dims):
        return pl.BlockSpec((None,) + dims, lambda i: (i,) + (0,) * len(dims))

    def resident(shape):
        return pl.BlockSpec(shape, lambda i: (0,) * len(shape))

    out_dtype = key.dtype  # matches the torch module's compute dtype
    ctx_g, attn_g = pl.pallas_call(
        kern,
        out_shape=(jax.ShapeDtypeStruct((nb, tb, D), out_dtype),
                   jax.ShapeDtypeStruct((nb, tb, m_pad), out_dtype)),
        grid=(nb,),
        in_specs=[
            per_step(tb * m_pad, EK),   # augmented key, rows pre-flattened for the MXU
            per_step(tb, D),            # folded query (+ all biases)
            per_step(tb, m_pad),        # lane-major mask
            resident((EK, D)),          # Wk_aug
            resident((EK, D)),          # Wv_aug
            resident((1, D)),           # bv
            resident((1, D)),           # scoring vector w^T
        ],
        out_specs=(per_step(tb, D), per_step(tb, m_pad)),
        compiler_params=pltpu.CompilerParams(
            dimension_semantics=("parallel",),
            vmem_limit_bytes=48 * 1024 * 1024),
    )(key_aug_g, q_g, mask_g, wk_aug, wv_aug,
      params["bv"].reshape(1, D).astype(f32),
      params["w"].reshape(1, D).astype(f32))

    ctx = ctx_g.reshape(b_pad, D)[:B].reshape(B, 1, D)
    attn = attn_g.reshape(b_pad, m_pad)[:B, :M].reshape(B, 1, M)
    return ctx, attn


def _reference(key, query, alpha, mask, params, *, inv_temperature=1.0,
               mask_val=-1e12):
    v = key @ params["wv"] + params["bv"]
    k = key @ params["wk"] + params["bk"]
    q = query @ params["wq"] + params["bq"]
    K = params["conv_w"].shape[-1]
    left = (K - 1) // 2
    right = K - 1 - left
    f = jax.lax.conv_general_dilated(
        alpha, params["conv_w"], window_strides=(1,), padding=[(left, right)],
        dimension_numbers=("NCW", "OIW", "NCW"))
    f = f + params["conv_b"][None, :, None]
    f = jnp.swapaxes(f, -1, -2)
    f = f @ params["wp"] + params["bp"]
    e = jnp.tanh(q + k + f)
    s = e @ params["w"]                                   # (B, M, 1)
    if mask is not None:
        s = jnp.where(mask[..., None], s, mask_val)
    s = s * inv_temperature
    attn = jax.nn.softmax(s, axis=-2)
    attn_t = jnp.swapaxes(attn, -1, -2)                   # (B, 1, M)
    ctx = attn_t @ v                                      # (B, 1, D)
    return ctx, attn_t


if __name__ == "__main__":
    B, M, E, D, K = 2, 16, 32, 32, 3
    inv_temperature = 1.0
    mask_val = -1e12

    root = jax.random.PRNGKey(0)
    keys = jax.random.split(root, 14)

    key_in = jax.random.normal(keys[0], (B, M, E), dtype=jnp.float32)
    query_in = jax.random.normal(keys[1], (B, 1, D), dtype=jnp.float32)
    alpha_in = jax.nn.softmax(
        jax.random.normal(keys[2], (B, 1, M), dtype=jnp.float32), axis=-1)
    lengths = jnp.array([M, 11])
    mask_in = jnp.arange(M)[None, :] < lengths[:, None]          # (B, M) bool

    def lin(kw, kb, fan_in, shape_w, shape_b):
        lim = 1.0 / jnp.sqrt(fan_in)
        w = jax.random.uniform(kw, shape_w, minval=-lim, maxval=lim,
                               dtype=jnp.float32)
        b = jax.random.uniform(kb, shape_b, minval=-lim, maxval=lim,
                               dtype=jnp.float32)
        return w, b

    # Linear weights stored transposed (in_features, out_features).
    wq, bq = lin(keys[3], keys[4], D, (D, D), (D,))
    wk, bk = lin(keys[5], keys[6], E, (E, D), (D,))
    wv, bv = lin(keys[7], keys[8], E, (E, D), (D,))
    # Conv1d(1 -> D, K): weight (D, 1, K), bias (D,)
    conv_w, conv_b = lin(keys[9], keys[10], 1 * K, (D, 1, K), (D,))
    wp, bp = lin(keys[11], keys[12], D, (D, D), (D,))
    w_score = jax.random.normal(keys[13], (D, 1), dtype=jnp.float32)

    params = dict(wq=wq, bq=bq, wk=wk, bk=bk, wv=wv, bv=bv,
                  conv_w=conv_w, conv_b=conv_b, wp=wp, bp=bp, w=w_score)

    ctx, attn = loc_aware_global_add_attention(
        key_in, query_in, alpha_in, mask_in, params,
        inv_temperature=inv_temperature, mask_val=mask_val)
    ctx = jax.block_until_ready(ctx)
    attn = jax.block_until_ready(attn)

    ctx_ref, attn_ref = _reference(
        key_in, query_in, alpha_in, mask_in, params,
        inv_temperature=inv_temperature, mask_val=mask_val)

    assert ctx.shape == (B, 1, D)
    assert attn.shape == (B, 1, M)
    assert jnp.allclose(ctx, ctx_ref, atol=1e-4, rtol=1e-4)
    assert jnp.allclose(attn, attn_ref, atol=1e-4, rtol=1e-4)

    print("KERNEL_OK")
</pallas_src>

<mosaic_0001>
module attributes {stable_mosaic.version = 11 : i64} {
  func.func @_attention_kernel(%arg0: i32, %arg1: memref<1x32x35xf32, #tpu.memory_space<vmem>>, %arg2: memref<1x2x32xf32, #tpu.memory_space<vmem>>, %arg3: memref<1x2x16xi32, #tpu.memory_space<vmem>>, %arg4: memref<35x32xf32, #tpu.memory_space<vmem>>, %arg5: memref<35x32xf32, #tpu.memory_space<vmem>>, %arg6: memref<1x32xf32, #tpu.memory_space<vmem>>, %arg7: memref<1x32xf32, #tpu.memory_space<vmem>>, %arg8: memref<1x2x32xf32, #tpu.memory_space<vmem>>, %arg9: memref<1x2x16xf32, #tpu.memory_space<vmem>>) attributes {dimension_semantics = [#tpu.dimension_semantics<parallel>], iteration_bounds = array<i64: 1>, scalar_prefetch = 0 : i64, scratch_operands = 0 : i64, tpu.core_type = #tpu.core_type<tc>, window_params = [{transform_indices = @transform_0, window_bounds = array<i64: 1, 32, 35>}, {transform_indices = @transform_1, window_bounds = array<i64: 1, 2, 32>}, {transform_indices = @transform_2, window_bounds = array<i64: 1, 2, 16>}, {pipeline_mode = #tpu.pipeline_mode<synchronous>, transform_indices = @transform_3, window_bounds = array<i64: 35, 32>}, {pipeline_mode = #tpu.pipeline_mode<synchronous>, transform_indices = @transform_4, window_bounds = array<i64: 35, 32>}, {pipeline_mode = #tpu.pipeline_mode<synchronous>, transform_indices = @transform_5, window_bounds = array<i64: 1, 32>}, {pipeline_mode = #tpu.pipeline_mode<synchronous>, transform_indices = @transform_6, window_bounds = array<i64: 1, 32>}, {transform_indices = @transform_7, window_bounds = array<i64: 1, 2, 32>}, {transform_indices = @transform_8, window_bounds = array<i64: 1, 2, 16>}]} {
    %c0 = arith.constant 0 : index
    %c0_0 = arith.constant 0 : index
    %c0_1 = arith.constant 0 : index
    %0 = vector.load %arg1[%c0, %c0_0, %c0_1] : memref<1x32x35xf32, #tpu.memory_space<vmem>>, vector<1x32x35xf32>
    %1 = vector.shape_cast %0 : vector<1x32x35xf32> to vector<32x35xf32>
    %c0_2 = arith.constant 0 : index
    %c0_3 = arith.constant 0 : index
    %2 = vector.load %arg4[%c0_2, %c0_3] : memref<35x32xf32, #tpu.memory_space<vmem>>, vector<35x32xf32>
    %cst = arith.constant dense<0.000000e+00> : vector<32x32xf32>
    %3 = tpu.matmul %1, %2, %cst {dimension_numbers = #tpu.dot_dimension_numbers<[1], [0], [0], [1], [0, 0, 1, 1], [], []>} : vector<32x35xf32>, vector<35x32xf32>, vector<32x32xf32> -> vector<32x32xf32>
    %c0_4 = arith.constant 0 : index
    %c0_5 = arith.constant 0 : index
    %4 = vector.load %arg5[%c0_4, %c0_5] : memref<35x32xf32, #tpu.memory_space<vmem>>, vector<35x32xf32>
    %cst_6 = arith.constant dense<0.000000e+00> : vector<32x32xf32>
    %5 = tpu.matmul %1, %4, %cst_6 {dimension_numbers = #tpu.dot_dimension_numbers<[1], [0], [0], [1], [0, 0, 1, 1], [], []>} : vector<32x35xf32>, vector<35x32xf32>, vector<32x32xf32> -> vector<32x32xf32>
    %c0_7 = arith.constant 0 : index
    %c0_8 = arith.constant 0 : index
    %6 = vector.load %arg6[%c0_7, %c0_8] : memref<1x32xf32, #tpu.memory_space<vmem>>, vector<1x32xf32>
    %7 = vector.broadcast %6 : vector<1x32xf32> to vector<32x32xf32>
    %8 = arith.addf %5, %7 : vector<32x32xf32>
    %9 = vector.shape_cast %3 : vector<32x32xf32> to vector<2x16x32xf32>
    %10 = vector.shape_cast %8 : vector<32x32xf32> to vector<2x16x32xf32>
    %c0_9 = arith.constant 0 : index
    %c0_10 = arith.constant 0 : index
    %c0_11 = arith.constant 0 : index
    %11 = vector.load %arg2[%c0_9, %c0_10, %c0_11] : memref<1x2x32xf32, #tpu.memory_space<vmem>>, vector<1x2x32xf32>
    %12 = vector.shape_cast %11 : vector<1x2x32xf32> to vector<2x32xf32>
    %13 = vector.shape_cast %12 : vector<2x32xf32> to vector<2x1x32xf32>
    %14 = vector.broadcast %13 : vector<2x1x32xf32> to vector<2x16x32xf32>
    %15 = arith.addf %9, %14 : vector<2x16x32xf32>
    %16 = math.tanh %15 : vector<2x16x32xf32>
    %c0_12 = arith.constant 0 : index
    %c0_13 = arith.constant 0 : index
    %17 = vector.load %arg7[%c0_12, %c0_13] : memref<1x32xf32, #tpu.memory_space<vmem>>, vector<1x32xf32>
    %18 = vector.shape_cast %17 : vector<1x32xf32> to vector<1x1x32xf32>
    %19 = vector.broadcast %18 : vector<1x1x32xf32> to vector<2x16x32xf32>
    %20 = arith.mulf %16, %19 : vector<2x16x32xf32>
    %cst_14 = arith.constant dense<0.000000e+00> : vector<2x16xf32>
    %21 = vector.multi_reduction <add>, %20, %cst_14 [2] : vector<2x16x32xf32> to vector<2x16xf32>
    %c0_15 = arith.constant 0 : index
    %c0_16 = arith.constant 0 : index
    %c0_17 = arith.constant 0 : index
    %22 = vector.load %arg3[%c0_15, %c0_16, %c0_17] : memref<1x2x16xi32, #tpu.memory_space<vmem>>, vector<1x2x16xi32>
    %23 = vector.shape_cast %22 : vector<1x2x16xi32> to vector<2x16xi32>
    %c0_i32 = arith.constant 0 : i32
    %24 = vector.broadcast %c0_i32 : i32 to vector<2x16xi32>
    %25 = arith.cmpi sgt, %23, %24 : vector<2x16xi32>
    %cst_18 = arith.constant -9.99999995E+11 : f32
    %26 = vector.broadcast %cst_18 : f32 to vector<2x16xf32>
    %27 = arith.select %25, %21, %26 : vector<2x16xi1>, vector<2x16xf32>
    %cst_19 = arith.constant 1.000000e+00 : f32
    %28 = vector.broadcast %cst_19 : f32 to vector<2x16xf32>
    %29 = arith.mulf %27, %28 : vector<2x16xf32>
    %cst_20 = arith.constant dense<0xFF800000> : vector<2xf32>
    %30 = vector.multi_reduction <maximumf>, %29, %cst_20 [1] : vector<2x16xf32> to vector<2xf32>
    %31 = vector.shape_cast %30 : vector<2xf32> to vector<2x1xf32>
    %32 = vector.broadcast %31 : vector<2x1xf32> to vector<2x16xf32>
    %33 = arith.subf %29, %32 : vector<2x16xf32>
    %34 = math.exp %33 : vector<2x16xf32>
    %cst_21 = arith.constant dense<0.000000e+00> : vector<2xf32>
    %35 = vector.multi_reduction <add>, %34, %cst_21 [1] : vector<2x16xf32> to vector<2xf32>
    %36 = vector.shape_cast %35 : vector<2xf32> to vector<2x1xf32>
    %37 = vector.broadcast %36 : vector<2x1xf32> to vector<2x16xf32>
    %38 = arith.divf %34, %37 : vector<2x16xf32>
    %c0_22 = arith.constant 0 : index
    %c0_23 = arith.constant 0 : index
    %c0_24 = arith.constant 0 : index
    %39 = vector.load %arg9[%c0_22, %c0_23, %c0_24] : memref<1x2x16xf32, #tpu.memory_space<vmem>>, vector<1x2x16xf32>
    %40 = vector.shape_cast %39 : vector<1x2x16xf32> to vector<2x16xf32>
    %41 = vector.shape_cast %38 : vector<2x16xf32> to vector<1x2x16xf32>
    tpu.vector_store %arg9[%c0_22, %c0_23, %c0_24], %41 {strides = array<i32>} : memref<1x2x16xf32, #tpu.memory_space<vmem>>, vector<1x2x16xf32>,
    %42 = vector.shape_cast %38 : vector<2x16xf32> to vector<2x1x16xf32>
    "tpu.trace_start"() <{level = 10 : i32, message = "bqm,bmd->bqd"}> : () -> ()
    %cst_25 = arith.constant dense<0.000000e+00> : vector<2x1x32xf32>
    %43 = tpu.matmul %42, %10, %cst_25 {dimension_numbers = #tpu.dot_dimension_numbers<[2], [1], [1], [2], [0, 0, 0, 1, 1, 2], [0], [0]>} : vector<2x1x16xf32>, vector<2x16x32xf32>, vector<2x1x32xf32> -> vector<2x1x32xf32>
    "tpu.trace_stop"() : () -> ()
    %44 = vector.shape_cast %43 : vector<2x1x32xf32> to vector<2x32xf32>
    %c0_26 = arith.constant 0 : index
    %c0_27 = arith.constant 0 : index
    %c0_28 = arith.constant 0 : index
    %45 = vector.load %arg8[%c0_26, %c0_27, %c0_28] : memref<1x2x32xf32, #tpu.memory_space<vmem>>, vector<1x2x32xf32>
    %46 = vector.shape_cast %45 : vector<1x2x32xf32> to vector<2x32xf32>
    %47 = vector.shape_cast %44 : vector<2x32xf32> to vector<1x2x32xf32>
    tpu.vector_store %arg8[%c0_26, %c0_27, %c0_28], %47 {strides = array<i32>} : memref<1x2x32xf32, #tpu.memory_space<vmem>>, vector<1x2x32xf32>,
    return
  }
  func.func @transform_0(%arg0: i32) -> (i32, i32, i32) {
    %c0_i32 = arith.constant 0 : i32
    %c0_i32_0 = arith.constant 0 : i32
    %c0_i32_1 = arith.constant 0 : i32
    return %arg0, %c0_i32, %c0_i32_0 : i32, i32, i32
  }
  func.func @transform_1(%arg0: i32) -> (i32, i32, i32) {
    %c0_i32 = arith.constant 0 : i32
    %c0_i32_0 = arith.constant 0 : i32
    %c0_i32_1 = arith.constant 0 : i32
    return %arg0, %c0_i32, %c0_i32_0 : i32, i32, i32
  }
  func.func @transform_2(%arg0: i32) -> (i32, i32, i32) {
    %c0_i32 = arith.constant 0 : i32
    %c0_i32_0 = arith.constant 0 : i32
    %c0_i32_1 = arith.constant 0 : i32
    return %arg0, %c0_i32, %c0_i32_0 : i32, i32, i32
  }
  func.func @transform_3(%arg0: i32) -> (i32, i32) {
    %c0_i32 = arith.constant 0 : i32
    %c0_i32_0 = arith.constant 0 : i32
    %c0_i32_1 = arith.constant 0 : i32
    return %c0_i32, %c0_i32_0 : i32, i32
  }
  func.func @transform_4(%arg0: i32) -> (i32, i32) {
    %c0_i32 = arith.constant 0 : i32
    %c0_i32_0 = arith.constant 0 : i32
    %c0_i32_1 = arith.constant 0 : i32
    return %c0_i32, %c0_i32_0 : i32, i32
  }
  func.func @transform_5(%arg0: i32) -> (i32, i32) {
    %c0_i32 = arith.constant 0 : i32
    %c0_i32_0 = arith.constant 0 : i32
    %c0_i32_1 = arith.constant 0 : i32
    return %c0_i32, %c0_i32_0 : i32, i32
  }
  func.func @transform_6(%arg0: i32) -> (i32, i32) {
    %c0_i32 = arith.constant 0 : i32
    %c0_i32_0 = arith.constant 0 : i32
    %c0_i32_1 = arith.constant 0 : i32
    return %c0_i32, %c0_i32_0 : i32, i32
  }
  func.func @transform_7(%arg0: i32) -> (i32, i32, i32) {
    %c0_i32 = arith.constant 0 : i32
    %c0_i32_0 = arith.constant 0 : i32
    %c0_i32_1 = arith.constant 0 : i32
    return %arg0, %c0_i32, %c0_i32_0 : i32, i32, i32
  }
  func.func @transform_8(%arg0: i32) -> (i32, i32, i32) {
    %c0_i32 = arith.constant 0 : i32
    %c0_i32_0 = arith.constant 0 : i32
    %c0_i32_1 = arith.constant 0 : i32
    return %arg0, %c0_i32, %c0_i32_0 : i32, i32, i32
  }
}

</mosaic_0001>

<llo_original>
// kernel: tpu_custom_call.1
$region0: #{tpu_custom_call.1}
  #allocation0 [shape = 'u32[]', space=smem, size = 0x4, offset = 0x4, fixed_abs, tag = 'smem constant byte address 0x4 - core index']
  #allocation1 [shape = 'u32[72,128]{1,0:T(1,128)}', space=vmem, size = 0x9000, scoped, tag = 'internal scratch']
  %s0 = inlined_call_operand.vmem [shape: f32[1,32,35], index: 0, kind: input, shape index: {}]
  %s1 = inlined_call_operand.vmem [shape: f32[1,2,32], index: 1, kind: input, shape index: {}]
  %s2 = inlined_call_operand.vmem [shape: s32[1,2,16], index: 2, kind: input, shape index: {}]
  %s3 = inlined_call_operand.vmem [shape: f32[35,32], index: 3, kind: input, shape index: {}]
  %s4 = inlined_call_operand.vmem [shape: f32[35,32], index: 4, kind: input, shape index: {}]
  %s5 = inlined_call_operand.vmem [shape: f32[1,32], index: 5, kind: input, shape index: {}]
  %s6 = inlined_call_operand.vmem [shape: f32[1,32], index: 6, kind: input, shape index: {}]
  %s7 = inlined_call_operand.hbm [shape: f32[1,2,32], index: 7, kind: output, shape index: {0}]
  %s8 = inlined_call_operand.hbm [shape: f32[1,2,16], index: 8, kind: output, shape index: {1}]
  %9 = xla_tuple %s7, %s8
  %s10 = sld [smem:[#allocation0]]
  $region46: #{tpu_custom_call.1} parent=0
    _
  %s12 = ssub.s32 1, %s10
  %s13 = scalar_select 0, %s12, %s10
  $region1: #{tpu_custom_call.1} parent=0
    #allocation2 [shape = 'u8[1024]{0}', space=vmem, size = 0x400, scoped, tag = 'output window, operand 0, single buffered']
    #allocation3 [shape = 's32[1]{0}', space=sflag, size = 0x4, scoped, tag = 'scoped memory for tpu_custom_call.1']
    #allocation4 [shape = 'u8[1024]{0}', space=vmem, size = 0x400, scoped, tag = 'output window, operand 1, single buffered']
    #allocation5 [shape = 's32[1]{0}', space=sflag, size = 0x4, scoped, tag = 'scoped memory for tpu_custom_call.1']
    %14 = vsyncpa [#allocation3], 0
    %15 = vsyncpa [#allocation5], 0
    // Predicated region
    $region2: #{tpu_custom_call.1} parent=1 // pred_check
      _
    $region3: #{tpu_custom_call.1} parent=1 // pred_check_branch
      %17 = sbr.rel (0) target = $region5
    $region4: #{tpu_custom_call.1} parent=1 // pred_region
      _
    $region5: #{tpu_custom_call.1} parent=1 // pred_fallthru
      _
    // Predicated region
    $region6: #{tpu_custom_call.1} parent=1 // pred_check
      _
    $region7: #{tpu_custom_call.1} parent=1 // pred_check_branch
      %19 = sbr.rel (0) target = $region9
    $region8: #{tpu_custom_call.1} parent=1 // pred_region
      _
    $region9: #{tpu_custom_call.1} parent=1 // pred_fallthru
      _
    // Predicated region
    $region10: #{tpu_custom_call.1} parent=1 // pred_check
      _
    $region11: #{tpu_custom_call.1} parent=1 // pred_check_branch
      %21 = sbr.rel (0) target = $region13
    $region12: #{tpu_custom_call.1} parent=1 // pred_region
      _
    $region13: #{tpu_custom_call.1} parent=1 // pred_fallthru
      _
    // Predicated region
    $region14: #{tpu_custom_call.1} parent=1 // pred_check
      _
    $region15: #{tpu_custom_call.1} parent=1 // pred_check_branch
      %23 = sbr.rel (0) target = $region17
    $region16: #{tpu_custom_call.1} parent=1 // pred_region
      _
    $region17: #{tpu_custom_call.1} parent=1 // pred_fallthru
      _
    // Predicated region
    $region18: #{tpu_custom_call.1} parent=1 // pred_check
      _
    $region19: #{tpu_custom_call.1} parent=1 // pred_check_branch
      %25 = sbr.rel (0) target = $region21
    $region20: #{tpu_custom_call.1} parent=1 // pred_region
      _
    $region21: #{tpu_custom_call.1} parent=1 // pred_fallthru
      _
    // Predicated region
    $region22: #{tpu_custom_call.1} parent=1 // pred_check
      _
    $region23: #{tpu_custom_call.1} parent=1 // pred_check_branch
      %27 = sbr.rel (0) target = $region25
    $region24: #{tpu_custom_call.1} parent=1 // pred_region
      _
    $region25: #{tpu_custom_call.1} parent=1 // pred_fallthru
      _
    // Predicated region
    $region26: #{tpu_custom_call.1} parent=1 // pred_check
      _
    $region27: #{tpu_custom_call.1} parent=1 // pred_check_branch
      %29 = sbr.rel (0) target = $region29
    $region28: #{tpu_custom_call.1} parent=1 // pred_region
      _
    $region29: #{tpu_custom_call.1} parent=1 // pred_fallthru
      _
    %v30 = vld [vmem:[%s0] sm:$0xff]
    %v31 = vld [vmem:[%s0 + $0x8] sm:$0xff]
    %v32 = vld [vmem:[%s0 + $0x10] sm:$0xff]
    %v33 = vld [vmem:[%s0 + $0x18] sm:$0xff]
    %v34 = vld [vmem:[%s3] sm:$0xff]
    %v35 = vld [vmem:[%s3 + $0x8] sm:$0xff]
    %v36 = vld [vmem:[%s3 + $0x10] sm:$0xff]
    %v37 = vld [vmem:[%s3 + $0x18] sm:$0xff]
    %v38 = vld [vmem:[%s3 + $0x20] sm:$0x7]
    %vm39 = vcmask 285696
    %v41 = vsel %vm39, %v30, 0
    %v44 = vsel %vm39, %v31, 0
    %v47 = vsel %vm39, %v32, 0
    %v50 = vsel %vm39, %v33, 0
    %vm52 = vcmask 1042432
    %v54 = vsel %vm52, %v38, 0
    %56 = vmatpush.msra.mxu0 0.0
    %57 = vmatpush.msra.mxu0 0.0
    %58 = vmatpush.msra.mxu0 0.0
    %59 = vmatpush.msra.mxu0 0.0
    %60 = vmatpush.msra.mxu0 0.0
    %61 = vmatpush.msra.mxu0 0.0
    %62 = vmatpush.msra.mxu0 0.0
    %63 = vmatpush.msra.mxu0 0.0
    %64 = vmatpush.msra.mxu0 0.0
    %65 = vmatpush.msra.mxu0 0.0
    %66 = vmatpush.msra.mxu0 0.0
    %67 = vmatpush.msra.mxu0 %v54
    %68 = vmatpush.msra.mxu0 %v37
    %69 = vmatpush.msra.mxu0 %v36
    %70 = vmatpush.msra.mxu0 %v35
    %71 = vmatpush.msra.mxu0 %v34
    %72 = vmatmul.f32.gmra.mxu0 %v41
    %v73 = vpop.f32.mrf.mxu0
    %v74 = vadd.f32 0.0, %v73
    %75 = vmatmul.f32.gmra.mxu0 %v44
    %v76 = vpop.f32.mrf.mxu0
    %v77 = vadd.f32 0.0, %v76
    %78 = vmatmul.f32.gmra.mxu0 %v47
    %v79 = vpop.f32.mrf.mxu0
    %v80 = vadd.f32 0.0, %v79
    %81 = vmatmul.f32.gmra.mxu0 %v50
    %v82 = vpop.f32.mrf.mxu0
    %v83 = vadd.f32 0.0, %v82
    %84 = vdwg.mxu0
    %v85 = vld [vmem:[%s4] sm:$0xff]
    %v86 = vld [vmem:[%s4 + $0x8] sm:$0xff]
    %v87 = vld [vmem:[%s4 + $0x10] sm:$0xff]
    %v88 = vld [vmem:[%s4 + $0x18] sm:$0xff]
    %v89 = vld [vmem:[%s4 + $0x20] sm:$0x7]
    %v90 = vld [vmem:[%s5] sm:$0x1]
    %v92 = vperm.slane %v90, 0
    %v95 = vsel %vm52, %v89, 0
    %97 = vmatpush.msra.mxu0 0.0
    %98 = vmatpush.msra.mxu0 0.0
    %99 = vmatpush.msra.mxu0 0.0
    %100 = vmatpush.msra.mxu0 0.0
    %101 = vmatpush.msra.mxu0 0.0
    %102 = vmatpush.msra.mxu0 0.0
    %103 = vmatpush.msra.mxu0 0.0
    %104 = vmatpush.msra.mxu0 0.0
    %105 = vmatpush.msra.mxu0 0.0
    %106 = vmatpush.msra.mxu0 0.0
    %107 = vmatpush.msra.mxu0 0.0
    %108 = vmatpush.msra.mxu0 %v95
    %109 = vmatpush.msra.mxu0 %v88
    %110 = vmatpush.msra.mxu0 %v87
    %111 = vmatpush.msra.mxu0 %v86
    %112 = vmatpush.msra.mxu0 %v85
    %113 = vmatmul.f32.gmra.mxu0 %v41
    %v114 = vpop.f32.mrf.mxu0
    %v115 = vadd.f32 %v92, %v114
    %116 = vmatmul.f32.gmra.mxu0 %v44
    %v117 = vpop.f32.mrf.mxu0
    %v118 = vadd.f32 %v92, %v117
    %119 = vmatmul.f32.gmra.mxu0 %v47
    %v120 = vpop.f32.mrf.mxu0
    %v121 = vadd.f32 %v92, %v120
    %122 = vmatmul.f32.gmra.mxu0 %v50
    %v123 = vpop.f32.mrf.mxu0
    %v124 = vadd.f32 %v92, %v123
    %125 = vdwg.mxu0
    %v126 = vld [vmem:[%s1] sm:$0x3]
    %v128 = vrot.slane %v126, 1
    %v129 = vperm.slane %v126, 0
    %v130 = vperm.slane %v128, 0
    %v133 = vadd.f32 %v74, %v129
    %v134 = vadd.f32 %v77, %v129
    %v135 = vadd.f32 %v80, %v130
    %v136 = vadd.f32 %v83, %v130
    %v137 = vtanh.pop %v133
    %v138 = vtanh.pop %v134
    %v139 = vtanh.pop %v135
    %v140 = vtanh.pop %v136
    %v141 = vld [vmem:[%s6] sm:$0x1]
    %v143 = vperm.slane %v141, 0
    %v145 = vmul.f32 %v137, %v143
    %v146 = vmul.f32 %v138, %v143
    %v147 = vmul.f32 %v139, %v143
    %v148 = vmul.f32 %v140, %v143
    %vm149 = vcmask 261120
    %v150 = vsel %vm149, %v145, 0.0
    %151 = vadd.xlane.f32.xlu0 %v150
    %v152 = vpop.xlane.xlu0 %151
    %v153 = vsel %vm149, %v146, 0.0
    %154 = vadd.xlane.f32.xlu0 %v153
    %v155 = vpop.xlane.xlu0 %154
    %v156 = vsel %vm149, %v147, 0.0
    %157 = vadd.xlane.f32.xlu0 %v156
    %v158 = vpop.xlane.xlu0 %157
    %v159 = vsel %vm149, %v148, 0.0
    %160 = vadd.xlane.f32.xlu0 %v159
    %v161 = vpop.xlane.xlu0 %160
    %v162 = vld [vmem:[%s2] sm:$0x3]
    %vm163 = vcmp.gt.s32.totalorder %v162, 0
    %v168 = vlaneseq
    %v169 = vand.u32 %v168, 127
    %v170 = vperm.slane %v152, %v169
    %v171 = vadd.s32 %v169, 4294967288
    %v172 = vperm.slane %v155, %v171
    %vm173 = vcmask 130112
    %v174 = vsel %vm173, %v172, %v170
    %v175 = vperm.slane %v158, %v169
    %v176 = vperm.slane %v161, %v171
    %v177 = vsel %vm173, %v176, %v175
    %vm178 = vcmask 1041409
    %v179 = vsel %vm178, %v177, %v174
    %v181 = vsel %vm163, %v179, -1e+12
    %vm182 = vcmask 123904
    %v183 = vsel %vm182, %v181, -inf
    %184 = vmax.xlane.f32.xlu0 %v183
    %v185 = vpop.xlane.xlu0 %184
    %v186 = vsub.f32 %v181, %v185
    %v187 = vmul.f32 %v186, 1.442695
    %v188 = vpow.pop %v187
    %v189 = vsel %vm182, %v188, 0.0
    %190 = vadd.xlane.f32.xlu0 %v189
    %v191 = vpop.xlane.xlu0 %190
    %v192 = vrcp.pop %v191
    %v193 = vmul.f32 %v191, %v192
    %v194 = vsub.f32 1.0, %v193
    %v195 = vmul.f32 %v192, %v194
    %v196 = vadd.f32 %v192, %v195
    %vm197 = vweird.f32 %v191
    %vm198 = vweird.f32 %v192
    %vm199 = vmor %vm197, %vm198
    %v200 = vsel %vm199, %v192, %v196
    %v201 = vand.u32 2147483647, %v191
    %vm202 = vcmp.eq.f32.partialorder %v201, 8.507059e+37
    %v203 = vand.u32 %v191, 2147483648
    %v204 = vor.u32 1.1754944e-38, %v203
    %v205 = vsel %vm202, %v204, %v200
    %v206 = vmul.f32 %v188, %v205
    %207 = vst.msk [vmem:[#allocation4] sm:$0x3] %vm182, %v206
    %v209 = vrot.slane %v206, 1
    %vm210 = vcmask 130048
    %v211 = vsel %vm210, %v206, 0
    %213 = vmatpush.msra.mxu0 0.0
    %214 = vmatpush.msra.mxu0 0.0
    %215 = vmatpush.msra.mxu0 0.0
    %216 = vmatpush.msra.mxu0 0.0
    %217 = vmatpush.msra.mxu0 0.0
    %218 = vmatpush.msra.mxu0 0.0
    %219 = vmatpush.msra.mxu0 0.0
    %220 = vmatpush.msra.mxu0 0.0
    %221 = vmatpush.msra.mxu0 0.0
    %222 = vmatpush.msra.mxu0 0.0
    %223 = vmatpush.msra.mxu0 0.0
    %224 = vmatpush.msra.mxu0 0.0
    %225 = vmatpush.msra.mxu0 0.0
    %226 = vmatpush.msra.mxu0 0.0
    %227 = vmatpush.msra.mxu0 %v118
    %228 = vmatpush.msra.mxu0 %v115
    %229 = vmatmul.f32.gmra.mxu0 %v211
    %v230 = vpop.f32.mrf.mxu0
    %v231 = vadd.f32 0.0, %v230
    %232 = vdwg.mxu0
    %v233 = vsel %vm210, %v209, 0
    %235 = vmatpush.msra.mxu0 0.0
    %236 = vmatpush.msra.mxu0 0.0
    %237 = vmatpush.msra.mxu0 0.0
    %238 = vmatpush.msra.mxu0 0.0
    %239 = vmatpush.msra.mxu0 0.0
    %240 = vmatpush.msra.mxu0 0.0
    %241 = vmatpush.msra.mxu0 0.0
    %242 = vmatpush.msra.mxu0 0.0
    %243 = vmatpush.msra.mxu0 0.0
    %244 = vmatpush.msra.mxu0 0.0
    %245 = vmatpush.msra.mxu0 0.0
    %246 = vmatpush.msra.mxu0 0.0
    %247 = vmatpush.msra.mxu0 0.0
    %248 = vmatpush.msra.mxu0 0.0
    %249 = vmatpush.msra.mxu0 %v124
    %250 = vmatpush.msra.mxu0 %v121
    %251 = vmatmul.f32.gmra.mxu0 %v233
    %v252 = vpop.f32.mrf.mxu0
    %v253 = vadd.f32 0.0, %v252
    %254 = vdwg.mxu0
    %v257 = vrot.slane %v253, 7
    %v258 = vsel %vm178, %v257, %v231
    %vm260 = vcmask 254976
    %261 = vst.msk [vmem:[#allocation2] sm:$0x3] %vm260, %v258
    // Predicated region
    $region30: #{tpu_custom_call.1} parent=1 // pred_check
      _
    $region31: #{tpu_custom_call.1} parent=1 // pred_check_branch
      %263 = sbr.rel (0) target = $region33
    $region32: #{tpu_custom_call.1} parent=1 // pred_region
      %265 = vsyncadd [#allocation3], 0
      %s267 = sshll.u32 [#allocation2], 4
      %s268 = int_to_ptr.vmem [resolvable:$true] %s267
      %s269 = sshll.u32 %s7, 4
      %s270 = int_to_ptr.hbm [resolvable:$true] %s269
      %272 = dma.vmem_to_hbm [thread:$0]  %s268, 32, %s270, [#allocation3]
    $region33: #{tpu_custom_call.1} parent=1 // pred_fallthru
      _
    // Predicated region
    $region34: #{tpu_custom_call.1} parent=1 // pred_check
      _
    $region35: #{tpu_custom_call.1} parent=1 // pred_check_branch
      %274 = sbr.rel (0) target = $region37
    $region36: #{tpu_custom_call.1} parent=1 // pred_region
      %276 = vsyncadd [#allocation5], 0
      %s278 = sshll.u32 [#allocation4], 4
      %s279 = int_to_ptr.vmem [resolvable:$true] %s278
      %s280 = sshll.u32 %s8, 4
      %s281 = int_to_ptr.hbm [resolvable:$true] %s280
      %283 = dma.vmem_to_hbm [thread:$0]  %s279, 32, %s281, [#allocation5]
    $region37: #{tpu_custom_call.1} parent=1 // pred_fallthru
      _
    // Predicated region
    $region38: #{tpu_custom_call.1} parent=1 // pred_check
      _
    $region39: #{tpu_custom_call.1} parent=1 // pred_check_branch
      %285 = sbr.rel (0) target = $region41
    $region40: #{tpu_custom_call.1} parent=1 // pred_region
      %287 = dma.done [#allocation3], 32
    $region41: #{tpu_custom_call.1} parent=1 // pred_fallthru
      _
    // Predicated region
    $region42: #{tpu_custom_call.1} parent=1 // pred_check
      _
    $region43: #{tpu_custom_call.1} parent=1 // pred_check_branch
      %289 = sbr.rel (0) target = $region45
    $region44: #{tpu_custom_call.1} parent=1 // pred_region
      %291 = dma.done [#allocation5], 32
    $region45: #{tpu_custom_call.1} parent=1 // pred_fallthru
      _
    %292 = vsyncpa [#allocation3], 1
    %293 = vsyncpa [#allocation5], 1

</llo_original>
